<compile_context>
chip_gen: v5e
topology: v5e:2x2
jax: 0.10.0
libtpu: 0.0.40
codegen_flags: <defaults>
</compile_context>

<pallas_src>
import jax
import jax.numpy as jnp
from jax.experimental import pallas as pl
from jax.experimental.pallas import tpu as pltpu


def _opseq_kernel(x_ref, w1t_ref, b1_ref, w2t_ref, b2_ref, o_ref):
    # x_ref: (Cin, T) tile, channels on sublanes, spatial on the lane axis.
    x = x_ref[...]
    # op 1: Conv2d 1x1 (Cin -> Cmid) + bias  ==  W1^T @ x + b1  (f32 accumulate)
    h = jnp.dot(w1t_ref[...], x, preferred_element_type=jnp.float32)
    h = h + b1_ref[...]
    # op 2: None entry -> dropped by OpSequential.__init__ (nothing to lower)
    # op 3: ReLU (kept in f32 on the VPU)
    h = jnp.maximum(h, 0.0)
    # op 4: Conv2d 1x1 (Cmid -> Cout) + bias
    y = jnp.dot(w2t_ref[...], h.astype(w2t_ref.dtype),
                preferred_element_type=jnp.float32)
    y = y + b2_ref[...]
    o_ref[...] = y.astype(o_ref.dtype)


def _pick_hw_tile(hw, max_tile):
    """Lane-dense (multiple-of-128) spatial tile that yields >=2 grid steps."""
    if hw <= 128:
        return hw                       # full-extent block satisfies (8,128) rule
    half = -(-hw // 2)                  # ceil(hw / 2): guarantees >= 2 steps
    half = -(-half // 128) * 128        # round up to a lane multiple
    t = min(max_tile, half, 16384)
    return max(128, (t // 128) * 128)


def op_sequential_forward(x_nchw, w1, b1, w2, b2, *, compute_dtype=jnp.bfloat16):
    """Fused OpSequential([Conv1x1, None, ReLU, Conv1x1]) forward.

    x_nchw: (N, Cin, H, W)  (PyTorch NCHW layout)
    w1: (Cin, Cmid), b1: (1, Cmid), w2: (Cmid, Cout), b2: (1, Cout)
    Returns (N, Cout, H, W) in `compute_dtype`.
    """
    N, Cin, H, W = x_nchw.shape
    Cmid = w1.shape[1]
    Cout = w2.shape[1]
    HW = H * W

    # bf16 I/O for the bandwidth-bound path; biases stay f32 (added in f32).
    xc = x_nchw.astype(compute_dtype)
    w1t = jnp.transpose(w1).astype(compute_dtype)      # (Cmid, Cin)
    w2t = jnp.transpose(w2).astype(compute_dtype)      # (Cout, Cmid)
    b1c = b1.reshape(Cmid, 1).astype(jnp.float32)
    b2c = b2.reshape(Cout, 1).astype(jnp.float32)

    # Channels-first: reshape only (no transpose, no extra HBM traffic).
    x3d = xc.reshape(N, Cin, HW)

    in_dsize = jnp.dtype(compute_dtype).itemsize
    out_dtype = compute_dtype
    out_dsize = jnp.dtype(out_dtype).itemsize

    # ---- generation-aware VMEM budgeting --------------------------------
    try:
        vmem_cap = int(pltpu.get_tpu_info().vmem_capacity_bytes)
    except Exception:
        vmem_cap = 64 << 20            # conservative (v7x-sized) fallback
    budget = (vmem_cap * 3) // 8       # pipelined working-set target w/ headroom

    # Bytes per spatial column: double-buffered x & out tiles plus the f32
    # intermediates (h, y) and the bf16 recast of h inside the kernel body.
    per_col = (2 * Cin * in_dsize + 2 * Cout * out_dsize
               + 4 * Cmid + 2 * Cmid + 4 * Cout)
    weight_bytes = (Cin * Cmid + Cmid * Cout) * in_dsize + (Cmid + Cout) * 4

    max_tile = max(128, ((budget - 2 * weight_bytes) // per_col) // 128 * 128)
    t_hw = _pick_hw_tile(HW, max_tile)
    grid = (N, pl.cdiv(HW, t_hw))

    est_bytes = t_hw * per_col + 2 * weight_bytes
    vmem_limit = max(32 << 20, min(int(est_bytes * 2), (vmem_cap * 3) // 4))

    cost = pl.CostEstimate(
        flops=2 * N * HW * (Cin * Cmid + Cmid * Cout),
        transcendentals=0,
        bytes_accessed=N * HW * (Cin * in_dsize + Cout * out_dsize)
        + (Cin * Cmid + Cmid * Cout) * in_dsize + (Cmid + Cout) * 4,
    )

    def _call(single_buffer_weights):
        const_kw = ({"pipeline_mode": pl.Buffered(buffer_count=1)}
                    if single_buffer_weights else {})
        grid_spec = pltpu.PrefetchScalarGridSpec(
            num_scalar_prefetch=0,
            grid=grid,
            in_specs=[
                # x tile: batch squeezed, Cin on sublanes, spatial on lanes.
                pl.BlockSpec((None, Cin, t_hw), lambda n, j: (n, 0, j)),
                # Resident parameters (constant index maps).
                pl.BlockSpec((Cmid, Cin), lambda n, j: (0, 0), **const_kw),
                pl.BlockSpec((Cmid, 1), lambda n, j: (0, 0), **const_kw),
                pl.BlockSpec((Cout, Cmid), lambda n, j: (0, 0), **const_kw),
                pl.BlockSpec((Cout, 1), lambda n, j: (0, 0), **const_kw),
            ],
            out_specs=pl.BlockSpec((None, Cout, t_hw), lambda n, j: (n, 0, j)),
        )
        return pl.pallas_call(
            _opseq_kernel,
            out_shape=jax.ShapeDtypeStruct((N, Cout, HW), out_dtype),
            grid_spec=grid_spec,
            compiler_params=pltpu.CompilerParams(
                dimension_semantics=("parallel", "parallel"),
                vmem_limit_bytes=vmem_limit),
            cost_estimate=cost,
        )(x3d, w1t, b1c, w2t, b2c)

    try:
        out3d = _call(True)            # single-buffered resident weights
    except Exception:
        out3d = _call(False)           # fallback: default double buffering

    # (N, Cout, H*W) -> (N, Cout, H, W) is free.
    return out3d.reshape(N, Cout, H, W)


if __name__ == "__main__":
    key = jax.random.PRNGKey(0)
    kx, k1, k2, k3, k4 = jax.random.split(key, 5)

    # Small shapes consistent with an NCHW 1x1-conv stack.
    N, Cin, H, W = 2, 4, 16, 16
    Cmid, Cout = 8, 4

    x = jax.random.normal(kx, (N, Cin, H, W), dtype=jnp.float32)
    # 1x1 conv weights stored as (Cin, Cout); biases as (1, C).
    w1 = jax.random.normal(k1, (Cin, Cmid), dtype=jnp.float32) * 0.1
    b1 = jax.random.normal(k2, (1, Cmid), dtype=jnp.float32) * 0.1
    w2 = jax.random.normal(k3, (Cmid, Cout), dtype=jnp.float32) * 0.1
    b2 = jax.random.normal(k4, (1, Cout), dtype=jnp.float32) * 0.1

    y = op_sequential_forward(x, w1, b1, w2, b2)
    y = jax.block_until_ready(y)

    # Reference (plain JAX, f32) of the same OpSequential semantics.
    x2d = jnp.transpose(x, (0, 2, 3, 1)).reshape(-1, Cin)
    ref = jnp.maximum(x2d @ w1 + b1, 0.0) @ w2 + b2
    ref = jnp.transpose(ref.reshape(N, H, W, Cout), (0, 3, 1, 2))
    # bf16 I/O path -> loosened tolerances.
    assert jnp.allclose(y.astype(jnp.float32), ref, atol=3e-2, rtol=3e-2)

    print("KERNEL_OK")
</pallas_src>

<mosaic_0001>
module attributes {stable_mosaic.version = 11 : i64} {
  func.func @_opseq_kernel(%arg0: i32, %arg1: i32, %arg2: memref<1x4x128xbf16, #tpu.memory_space<vmem>>, %arg3: memref<8x4xbf16, #tpu.memory_space<vmem>>, %arg4: memref<8x1xf32, #tpu.memory_space<vmem>>, %arg5: memref<4x8xbf16, #tpu.memory_space<vmem>>, %arg6: memref<4x1xf32, #tpu.memory_space<vmem>>, %arg7: memref<1x4x128xbf16, #tpu.memory_space<vmem>>) attributes {dimension_semantics = [#tpu.dimension_semantics<parallel>, #tpu.dimension_semantics<parallel>], iteration_bounds = array<i64: 2, 2>, scalar_prefetch = 0 : i64, scratch_operands = 0 : i64, tpu.core_type = #tpu.core_type<tc>, window_params = [{transform_indices = @transform_0, window_bounds = array<i64: 1, 4, 128>}, {pipeline_mode = #tpu.pipeline_mode<synchronous>, transform_indices = @transform_1, window_bounds = array<i64: 8, 4>}, {pipeline_mode = #tpu.pipeline_mode<synchronous>, transform_indices = @transform_2, window_bounds = array<i64: 8, 1>}, {pipeline_mode = #tpu.pipeline_mode<synchronous>, transform_indices = @transform_3, window_bounds = array<i64: 4, 8>}, {pipeline_mode = #tpu.pipeline_mode<synchronous>, transform_indices = @transform_4, window_bounds = array<i64: 4, 1>}, {transform_indices = @transform_5, window_bounds = array<i64: 1, 4, 128>}]} {
    %c0 = arith.constant 0 : index
    %c0_0 = arith.constant 0 : index
    %c0_1 = arith.constant 0 : index
    %0 = vector.load %arg2[%c0, %c0_0, %c0_1] : memref<1x4x128xbf16, #tpu.memory_space<vmem>>, vector<1x4x128xbf16>
    %1 = vector.shape_cast %0 : vector<1x4x128xbf16> to vector<4x128xbf16>
    %c0_2 = arith.constant 0 : index
    %c0_3 = arith.constant 0 : index
    %2 = vector.load %arg3[%c0_2, %c0_3] : memref<8x4xbf16, #tpu.memory_space<vmem>>, vector<8x4xbf16>
    %cst = arith.constant dense<0.000000e+00> : vector<8x128xf32>
    %3 = tpu.matmul %2, %1, %cst {dimension_numbers = #tpu.dot_dimension_numbers<[1], [0], [0], [1], [0, 0, 1, 1], [], []>} : vector<8x4xbf16>, vector<4x128xbf16>, vector<8x128xf32> -> vector<8x128xf32>
    %c0_4 = arith.constant 0 : index
    %c0_5 = arith.constant 0 : index
    %4 = vector.load %arg4[%c0_4, %c0_5] : memref<8x1xf32, #tpu.memory_space<vmem>>, vector<8x1xf32>
    %5 = vector.broadcast %4 : vector<8x1xf32> to vector<8x128xf32>
    %6 = arith.addf %3, %5 : vector<8x128xf32>
    %cst_6 = arith.constant 0.000000e+00 : f32
    %7 = vector.broadcast %cst_6 : f32 to vector<8x128xf32>
    %8 = arith.maximumf %6, %7 : vector<8x128xf32>
    %c0_7 = arith.constant 0 : index
    %c0_8 = arith.constant 0 : index
    %9 = vector.load %arg5[%c0_7, %c0_8] : memref<4x8xbf16, #tpu.memory_space<vmem>>, vector<4x8xbf16>
    %10 = arith.truncf %8 : vector<8x128xf32> to vector<8x128xbf16>
    %cst_9 = arith.constant dense<0.000000e+00> : vector<4x128xf32>
    %11 = tpu.matmul %9, %10, %cst_9 {dimension_numbers = #tpu.dot_dimension_numbers<[1], [0], [0], [1], [0, 0, 1, 1], [], []>} : vector<4x8xbf16>, vector<8x128xbf16>, vector<4x128xf32> -> vector<4x128xf32>
    %c0_10 = arith.constant 0 : index
    %c0_11 = arith.constant 0 : index
    %12 = vector.load %arg6[%c0_10, %c0_11] : memref<4x1xf32, #tpu.memory_space<vmem>>, vector<4x1xf32>
    %13 = vector.broadcast %12 : vector<4x1xf32> to vector<4x128xf32>
    %14 = arith.addf %11, %13 : vector<4x128xf32>
    %15 = arith.truncf %14 : vector<4x128xf32> to vector<4x128xbf16>
    %c0_12 = arith.constant 0 : index
    %c0_13 = arith.constant 0 : index
    %c0_14 = arith.constant 0 : index
    %16 = vector.load %arg7[%c0_12, %c0_13, %c0_14] : memref<1x4x128xbf16, #tpu.memory_space<vmem>>, vector<1x4x128xbf16>
    %17 = vector.shape_cast %16 : vector<1x4x128xbf16> to vector<4x128xbf16>
    %18 = vector.shape_cast %15 : vector<4x128xbf16> to vector<1x4x128xbf16>
    tpu.vector_store %arg7[%c0_12, %c0_13, %c0_14], %18 {strides = array<i32>} : memref<1x4x128xbf16, #tpu.memory_space<vmem>>, vector<1x4x128xbf16>,
    return
  }
  func.func @transform_0(%arg0: i32, %arg1: i32) -> (i32, i32, i32) {
    %c0_i32 = arith.constant 0 : i32
    %c0_i32_0 = arith.constant 0 : i32
    return %arg0, %c0_i32, %arg1 : i32, i32, i32
  }
  func.func @transform_1(%arg0: i32, %arg1: i32) -> (i32, i32) {
    %c0_i32 = arith.constant 0 : i32
    %c0_i32_0 = arith.constant 0 : i32
    %c0_i32_1 = arith.constant 0 : i32
    return %c0_i32, %c0_i32_0 : i32, i32
  }
  func.func @transform_2(%arg0: i32, %arg1: i32) -> (i32, i32) {
    %c0_i32 = arith.constant 0 : i32
    %c0_i32_0 = arith.constant 0 : i32
    %c0_i32_1 = arith.constant 0 : i32
    return %c0_i32, %c0_i32_0 : i32, i32
  }
  func.func @transform_3(%arg0: i32, %arg1: i32) -> (i32, i32) {
    %c0_i32 = arith.constant 0 : i32
    %c0_i32_0 = arith.constant 0 : i32
    %c0_i32_1 = arith.constant 0 : i32
    return %c0_i32, %c0_i32_0 : i32, i32
  }
  func.func @transform_4(%arg0: i32, %arg1: i32) -> (i32, i32) {
    %c0_i32 = arith.constant 0 : i32
    %c0_i32_0 = arith.constant 0 : i32
    %c0_i32_1 = arith.constant 0 : i32
    return %c0_i32, %c0_i32_0 : i32, i32
  }
  func.func @transform_5(%arg0: i32, %arg1: i32) -> (i32, i32, i32) {
    %c0_i32 = arith.constant 0 : i32
    %c0_i32_0 = arith.constant 0 : i32
    return %arg0, %c0_i32, %arg1 : i32, i32, i32
  }
}

module attributes {stable_mosaic.version = 11 : i64} {
  func.func @_opseq_kernel(%arg0: i32, %arg1: i32, %arg2: memref<1x4x128xbf16, #tpu.memory_space<vmem>>, %arg3: memref<8x4xbf16, #tpu.memory_space<vmem>>, %arg4: memref<8x1xf32, #tpu.memory_space<vmem>>, %arg5: memref<4x8xbf16, #tpu.memory_space<vmem>>, %arg6: memref<4x1xf32, #tpu.memory_space<vmem>>, %arg7: memref<1x4x128xbf16, #tpu.memory_space<vmem>>) attributes {dimension_semantics = [#tpu.dimension_semantics<parallel>, #tpu.dimension_semantics<parallel>], iteration_bounds = array<i64: 2, 2>, scalar_prefetch = 0 : i64, scratch_operands = 0 : i64, tpu.core_type = #tpu.core_type<tc>, window_params = [{transform_indices = @transform_0, window_bounds = array<i64: 1, 4, 128>}, {pipeline_mode = #tpu.pipeline_mode<synchronous>, transform_indices = @transform_1, window_bounds = array<i64: 8, 4>}, {pipeline_mode = #tpu.pipeline_mode<synchronous>, transform_indices = @transform_2, window_bounds = array<i64: 8, 1>}, {pipeline_mode = #tpu.pipeline_mode<synchronous>, transform_indices = @transform_3, window_bounds = array<i64: 4, 8>}, {pipeline_mode = #tpu.pipeline_mode<synchronous>, transform_indices = @transform_4, window_bounds = array<i64: 4, 1>}, {transform_indices = @transform_5, window_bounds = array<i64: 1, 4, 128>}]} {
    %c0 = arith.constant 0 : index
    %c0_0 = arith.constant 0 : index
    %c0_1 = arith.constant 0 : index
    %0 = vector.load %arg2[%c0, %c0_0, %c0_1] : memref<1x4x128xbf16, #tpu.memory_space<vmem>>, vector<1x4x128xbf16>
    %1 = vector.shape_cast %0 : vector<1x4x128xbf16> to vector<4x128xbf16>
    %c0_2 = arith.constant 0 : index
    %c0_3 = arith.constant 0 : index
    %2 = vector.load %arg3[%c0_2, %c0_3] : memref<8x4xbf16, #tpu.memory_space<vmem>>, vector<8x4xbf16>
    %cst = arith.constant dense<0.000000e+00> : vector<8x128xf32>
    %3 = tpu.matmul %2, %1, %cst {dimension_numbers = #tpu.dot_dimension_numbers<[1], [0], [0], [1], [0, 0, 1, 1], [], []>} : vector<8x4xbf16>, vector<4x128xbf16>, vector<8x128xf32> -> vector<8x128xf32>
    %c0_4 = arith.constant 0 : index
    %c0_5 = arith.constant 0 : index
    %4 = vector.load %arg4[%c0_4, %c0_5] : memref<8x1xf32, #tpu.memory_space<vmem>>, vector<8x1xf32>
    %5 = vector.broadcast %4 : vector<8x1xf32> to vector<8x128xf32>
    %6 = arith.addf %3, %5 : vector<8x128xf32>
    %cst_6 = arith.constant 0.000000e+00 : f32
    %7 = vector.broadcast %cst_6 : f32 to vector<8x128xf32>
    %8 = arith.maximumf %6, %7 : vector<8x128xf32>
    %c0_7 = arith.constant 0 : index
    %c0_8 = arith.constant 0 : index
    %9 = vector.load %arg5[%c0_7, %c0_8] : memref<4x8xbf16, #tpu.memory_space<vmem>>, vector<4x8xbf16>
    %10 = arith.truncf %8 : vector<8x128xf32> to vector<8x128xbf16>
    %cst_9 = arith.constant dense<0.000000e+00> : vector<4x128xf32>
    %11 = tpu.matmul %9, %10, %cst_9 {dimension_numbers = #tpu.dot_dimension_numbers<[1], [0], [0], [1], [0, 0, 1, 1], [], []>} : vector<4x8xbf16>, vector<8x128xbf16>, vector<4x128xf32> -> vector<4x128xf32>
    %c0_10 = arith.constant 0 : index
    %c0_11 = arith.constant 0 : index
    %12 = vector.load %arg6[%c0_10, %c0_11] : memref<4x1xf32, #tpu.memory_space<vmem>>, vector<4x1xf32>
    %13 = vector.broadcast %12 : vector<4x1xf32> to vector<4x128xf32>
    %14 = arith.addf %11, %13 : vector<4x128xf32>
    %15 = arith.truncf %14 : vector<4x128xf32> to vector<4x128xbf16>
    %c0_12 = arith.constant 0 : index
    %c0_13 = arith.constant 0 : index
    %c0_14 = arith.constant 0 : index
    %16 = vector.load %arg7[%c0_12, %c0_13, %c0_14] : memref<1x4x128xbf16, #tpu.memory_space<vmem>>, vector<1x4x128xbf16>
    %17 = vector.shape_cast %16 : vector<1x4x128xbf16> to vector<4x128xbf16>
    %18 = vector.shape_cast %15 : vector<4x128xbf16> to vector<1x4x128xbf16>
    tpu.vector_store %arg7[%c0_12, %c0_13, %c0_14], %18 {strides = array<i32>} : memref<1x4x128xbf16, #tpu.memory_space<vmem>>, vector<1x4x128xbf16>,
    return
  }
  func.func @transform_0(%arg0: i32, %arg1: i32) -> (i32, i32, i32) {
    %c0_i32 = arith.constant 0 : i32
    %c0_i32_0 = arith.constant 0 : i32
    return %arg0, %c0_i32, %arg1 : i32, i32, i32
  }
  func.func @transform_1(%arg0: i32, %arg1: i32) -> (i32, i32) {
    %c0_i32 = arith.constant 0 : i32
    %c0_i32_0 = arith.constant 0 : i32
    %c0_i32_1 = arith.constant 0 : i32
    return %c0_i32, %c0_i32_0 : i32, i32
  }
  func.func @transform_2(%arg0: i32, %arg1: i32) -> (i32, i32) {
    %c0_i32 = arith.constant 0 : i32
    %c0_i32_0 = arith.constant 0 : i32
    %c0_i32_1 = arith.constant 0 : i32
    return %c0_i32, %c0_i32_0 : i32, i32
  }
  func.func @transform_3(%arg0: i32, %arg1: i32) -> (i32, i32) {
    %c0_i32 = arith.constant 0 : i32
    %c0_i32_0 = arith.constant 0 : i32
    %c0_i32_1 = arith.constant 0 : i32
    return %c0_i32, %c0_i32_0 : i32, i32
  }
  func.func @transform_4(%arg0: i32, %arg1: i32) -> (i32, i32) {
    %c0_i32 = arith.constant 0 : i32
    %c0_i32_0 = arith.constant 0 : i32
    %c0_i32_1 = arith.constant 0 : i32
    return %c0_i32, %c0_i32_0 : i32, i32
  }
  func.func @transform_5(%arg0: i32, %arg1: i32) -> (i32, i32, i32) {
    %c0_i32 = arith.constant 0 : i32
    %c0_i32_0 = arith.constant 0 : i32
    return %arg0, %c0_i32, %arg1 : i32, i32, i32
  }
}

</mosaic_0001>

<llo_original>
// kernel: tpu_custom_call.1
$region0: #{tpu_custom_call.1}
  #allocation0 [shape = 'u32[]', space=smem, size = 0x4, offset = 0x4, fixed_abs, tag = 'smem constant byte address 0x4 - core index']
  #allocation1 [shape = 'u32[72,128]{1,0:T(1,128)}', space=vmem, size = 0x9000, scoped, tag = 'internal scratch']
  %s0 = inlined_call_operand.vmem [shape: bf16[2,4,256], index: 0, kind: input, shape index: {}]
  %s1 = inlined_call_operand.vmem [shape: bf16[8,4], index: 1, kind: input, shape index: {}]
  %s2 = inlined_call_operand.vmem [shape: f32[8,1], index: 2, kind: input, shape index: {}]
  %s3 = inlined_call_operand.vmem [shape: bf16[4,8], index: 3, kind: input, shape index: {}]
  %s4 = inlined_call_operand.vmem [shape: f32[4,1], index: 4, kind: input, shape index: {}]
  %s5 = inlined_call_operand.hbm [shape: bf16[2,4,256], index: 5, kind: output, shape index: {}]
  %s6 = sld [smem:[#allocation0]]
  $region53: #{tpu_custom_call.1} parent=0
    _
  %s8 = ssub.s32 1, %s6
  %s9 = scalar_select 0, %s8, %s6
  $region1: #{tpu_custom_call.1} parent=0
    #allocation2 [shape = 'u8[2048]{0}', space=vmem, size = 0x800, scoped, tag = 'output window, operand 0']
    #allocation3 [shape = 's32[2]{0}', space=sflag, size = 0x8, scoped, tag = 'scoped memory for tpu_custom_call.1']
    %10 = vsyncpa [#allocation3], 0
    %s11 = scalar_lea.sflag [#allocation3], 1
    %12 = vsyncpa %s11, 0
    loop: start=0, step=1, limit=6
    $region2: #{tpu_custom_call.1} parent=1 // loop_pre_header
      _
    $region3: #{tpu_custom_call.1} parent=1 // loop_header
      %s14 = sphi 0, %s18
      %p15 = scmp.ge.s32.totalorder %s14, 6
      %s21 = sphi 0, %s33
      %s22 = sphi 0, %s29
      %s23 = sphi 0, %s21
      %s24 = sphi 0, %s22
      %s25 = sphi 0, %s23
      %s26 = sphi 0, %s24
      %s38 = sphi 0, %s40
      %s41 = sphi 0, %s38
      %s42 = sphi 0, %s41
      %s58 = sphi 0, %s42
      %s62 = sphi 0, %s62
      %s64 = sphi 0, %s62
      %s65 = sphi 0, %s64
      %s79 = sphi 0, %s65
      %s83 = sphi 0, %s83
      %s85 = sphi 0, %s83
      %s86 = sphi 0, %s85
      %s100 = sphi 0, %s86
      %s104 = sphi 0, %s104
      %s106 = sphi 0, %s104
      %s107 = sphi 0, %s106
      %s121 = sphi 0, %s107
      %s125 = sphi 0, %s125
      %s127 = sphi 0, %s125
      %s128 = sphi 0, %s127
      %s142 = sphi 0, %s128
      %s150 = sphi 0, %s152
      %s153 = sphi 0, %s150
      %s154 = sphi 0, %s153
      %s170 = sphi 0, %s154
    $region4: #{tpu_custom_call.1} parent=1 // loop_header_branch
      %17 = sbr.rel (%p15) target = $region8
    $region5: #{tpu_custom_call.1} parent=1 // loop_body
      %s19 = ssub.s32 %s14, 1
      %s20 = ssub.s32 %s14, 2
      %s27 = sadd.s32 1, %s22
      %p28 = scmp.ge.s32.totalorder %s27, 2
      %s29 = scalar_select %p28, 0, %s27
      %s30 = sadd.s32 1, %s21
      %s31 = scalar_select %p28, %s30, %s21
      %p32 = scmp.ge.s32.totalorder %s31, 2
      %s33 = scalar_select %p32, 0, %s31
      %s34 = ssub.s32 %s21, %s33
      %s35 = ssub.s32 %s22, %s29
      %s36 = sor.u32 %s34, %s35
      %p37 = scmp.eq.s32.totalorder %s36, 0
      %s39 = sadd.s32 %s38, 1
      %s40 = scalar_select %p37, %s38, %s39
      %p43 = pneg %p37
      %p44 = scmp.eq.s32.totalorder %s14, 3
      %p45 = por %p43, %p44
      %p46 = scmp.ne.s32.totalorder %s38, %s41
      %p47 = scmp.eq.s32.totalorder %s14, 0
      %p48 = por %p46, %p47
      %p49 = scmp.ne.s32.totalorder %s38, %s41
      %p50 = scmp.eq.s32.totalorder %s19, 3
      %p51 = por %p49, %p50
      %p52 = scmp.ne.s32.totalorder %s41, %s42
      %p53 = scmp.eq.s32.totalorder %s19, 0
      %p54 = por %p52, %p53
      %p55 = scmp.ne.s32.totalorder %s41, %s42
      %p56 = scmp.eq.s32.totalorder %s20, 3
      %p57 = por %p55, %p56
      %p59 = scmp.ne.s32.totalorder %s42, %s58
      %p60 = scmp.eq.s32.totalorder %s20, 0
      %p61 = por %p59, %p60
      %s63 = sadd.s32 %s62, 1
      %p66 = scmp.eq.s32.totalorder %s14, 3
      %p67 = scmp.ne.s32.totalorder %s62, %s64
      %p68 = scmp.eq.s32.totalorder %s14, 0
      %p69 = por %p67, %p68
      %p70 = scmp.ne.s32.totalorder %s62, %s64
      %p71 = scmp.eq.s32.totalorder %s19, 3
      %p72 = por %p70, %p71
      %p73 = scmp.ne.s32.totalorder %s64, %s65
      %p74 = scmp.eq.s32.totalorder %s19, 0
      %p75 = por %p73, %p74
      %p76 = scmp.ne.s32.totalorder %s64, %s65
      %p77 = scmp.eq.s32.totalorder %s20, 3
      %p78 = por %p76, %p77
      %p80 = scmp.ne.s32.totalorder %s65, %s79
      %p81 = scmp.eq.s32.totalorder %s20, 0
      %p82 = por %p80, %p81
      %s84 = sadd.s32 %s83, 1
      %p87 = scmp.eq.s32.totalorder %s14, 3
      %p88 = scmp.ne.s32.totalorder %s83, %s85
      %p89 = scmp.eq.s32.totalorder %s14, 0
      %p90 = por %p88, %p89
      %p91 = scmp.ne.s32.totalorder %s83, %s85
      %p92 = scmp.eq.s32.totalorder %s19, 3
      %p93 = por %p91, %p92
      %p94 = scmp.ne.s32.totalorder %s85, %s86
      %p95 = scmp.eq.s32.totalorder %s19, 0
      %p96 = por %p94, %p95
      %p97 = scmp.ne.s32.totalorder %s85, %s86
      %p98 = scmp.eq.s32.totalorder %s20, 3
      %p99 = por %p97, %p98
      %p101 = scmp.ne.s32.totalorder %s86, %s100
      %p102 = scmp.eq.s32.totalorder %s20, 0
      %p103 = por %p101, %p102
      %s105 = sadd.s32 %s104, 1
      %p108 = scmp.eq.s32.totalorder %s14, 3
      %p109 = scmp.ne.s32.totalorder %s104, %s106
      %p110 = scmp.eq.s32.totalorder %s14, 0
      %p111 = por %p109, %p110
      %p112 = scmp.ne.s32.totalorder %s104, %s106
      %p113 = scmp.eq.s32.totalorder %s19, 3
      %p114 = por %p112, %p113
      %p115 = scmp.ne.s32.totalorder %s106, %s107
      %p116 = scmp.eq.s32.totalorder %s19, 0
      %p117 = por %p115, %p116
      %p118 = scmp.ne.s32.totalorder %s106, %s107
      %p119 = scmp.eq.s32.totalorder %s20, 3
      %p120 = por %p118, %p119
      %p122 = scmp.ne.s32.totalorder %s107, %s121
      %p123 = scmp.eq.s32.totalorder %s20, 0
      %p124 = por %p122, %p123
      %s126 = sadd.s32 %s125, 1
      %p129 = scmp.eq.s32.totalorder %s14, 3
      %p130 = scmp.ne.s32.totalorder %s125, %s127
      %p131 = scmp.eq.s32.totalorder %s14, 0
      %p132 = por %p130, %p131
      %p133 = scmp.ne.s32.totalorder %s125, %s127
      %p134 = scmp.eq.s32.totalorder %s19, 3
      %p135 = por %p133, %p134
      %p136 = scmp.ne.s32.totalorder %s127, %s128
      %p137 = scmp.eq.s32.totalorder %s19, 0
      %p138 = por %p136, %p137
      %p139 = scmp.ne.s32.totalorder %s127, %s128
      %p140 = scmp.eq.s32.totalorder %s20, 3
      %p141 = por %p139, %p140
      %p143 = scmp.ne.s32.totalorder %s128, %s142
      %p144 = scmp.eq.s32.totalorder %s20, 0
      %p145 = por %p143, %p144
      %s146 = ssub.s32 %s21, %s33
      %s147 = ssub.s32 %s22, %s29
      %s148 = sor.u32 %s146, %s147
      %p149 = scmp.eq.s32.totalorder %s148, 0
      %s151 = sadd.s32 %s150, 1
      %s152 = scalar_select %p149, %s150, %s151
      %p155 = pneg %p149
      %p156 = scmp.eq.s32.totalorder %s14, 3
      %p157 = por %p155, %p156
      %p158 = scmp.ne.s32.totalorder %s150, %s153
      %p159 = scmp.eq.s32.totalorder %s14, 0
      %p160 = por %p158, %p159
      %p161 = scmp.ne.s32.totalorder %s150, %s153
      %p162 = scmp.eq.s32.totalorder %s19, 3
      %p163 = por %p161, %p162
      %p164 = scmp.ne.s32.totalorder %s153, %s154
      %p165 = scmp.eq.s32.totalorder %s19, 0
      %p166 = por %p164, %p165
      %p167 = scmp.ne.s32.totalorder %s153, %s154
      %p168 = scmp.eq.s32.totalorder %s20, 3
      %p169 = por %p167, %p168
      %p171 = scmp.ne.s32.totalorder %s154, %s170
      %p172 = scmp.eq.s32.totalorder %s20, 0
      %p173 = por %p171, %p172
      %p174 = scmp.le.s32.totalorder 1, %s14
      %p175 = scmp.lt.s32.totalorder %s14, 5
      %p176 = pnand %p174, %p175
      %p177 = pneg %p176
      // Predicated region
      $region9: #{tpu_custom_call.1} parent=5 // pred_check
        _
      $region10: #{tpu_custom_call.1} parent=5 // pred_check_branch
        %179 = sbr.rel (%p176) target = $region12
      $region11: #{tpu_custom_call.1} parent=5 // pred_region
        %s180 = ssub.s32 %s14, 1
        // Predicated region
        $region13: #{tpu_custom_call.1} parent=11 // pred_check
          %p181 = pneg %p75
        $region14: #{tpu_custom_call.1} parent=11 // pred_check_branch
          %183 = sbr.rel (%p181) target = $region16
        $region15: #{tpu_custom_call.1} parent=11 // pred_region
          _
        $region16: #{tpu_custom_call.1} parent=11 // pred_fallthru
          _
        // Predicated region
        $region17: #{tpu_custom_call.1} parent=11 // pred_check
          %p184 = pneg %p96
        $region18: #{tpu_custom_call.1} parent=11 // pred_check_branch
          %186 = sbr.rel (%p184) target = $region20
        $region19: #{tpu_custom_call.1} parent=11 // pred_region
          _
        $region20: #{tpu_custom_call.1} parent=11 // pred_fallthru
          _
        // Predicated region
        $region21: #{tpu_custom_call.1} parent=11 // pred_check
          %p187 = pneg %p117
        $region22: #{tpu_custom_call.1} parent=11 // pred_check_branch
          %189 = sbr.rel (%p187) target = $region24
        $region23: #{tpu_custom_call.1} parent=11 // pred_region
          _
        $region24: #{tpu_custom_call.1} parent=11 // pred_fallthru
          _
        // Predicated region
        $region25: #{tpu_custom_call.1} parent=11 // pred_check
          %p190 = pneg %p138
        $region26: #{tpu_custom_call.1} parent=11 // pred_check_branch
          %192 = sbr.rel (%p190) target = $region28
        $region27: #{tpu_custom_call.1} parent=11 // pred_region
          _
        $region28: #{tpu_custom_call.1} parent=11 // pred_fallthru
          _
      $region12: #{tpu_custom_call.1} parent=5 // pred_fallthru
        _
      %p193 = scmp.lt.s32.totalorder %s14, 4
      // Predicated region
      $region29: #{tpu_custom_call.1} parent=5 // pred_check
        %p194 = pneg %p193
      $region30: #{tpu_custom_call.1} parent=5 // pred_check_branch
        %196 = sbr.rel (%p194) target = $region32
      $region31: #{tpu_custom_call.1} parent=5 // pred_region
        // Predicated region
        $region33: #{tpu_custom_call.1} parent=31 // pred_check
          %p197 = pneg %p48
        $region34: #{tpu_custom_call.1} parent=31 // pred_check_branch
          %199 = sbr.rel (%p197) target = $region36
        $region35: #{tpu_custom_call.1} parent=31 // pred_region
          %p200 = scmp.lt.s32.totalorder %s21, 1
          %s201 = scalar_select %p200, %s21, 1
          %p202 = scmp.lt.s32.totalorder %s22, 1
          %s203 = scalar_select %p202, %s22, 1
          %s204 = smul.addr %s201, 2
          %s205 = sadd.s32 %s203, %s204
          %s206 = smul.addr %s205, 2
          %s207 = scalar_lea.vmem %s0, %s206
        $region36: #{tpu_custom_call.1} parent=31 // pred_fallthru
          _
      $region32: #{tpu_custom_call.1} parent=5 // pred_fallthru
        _
      %p208 = scmp.le.s32.totalorder 1, %s14
      %p209 = scmp.lt.s32.totalorder %s14, 5
      %p210 = pnand %p208, %p209
      %p211 = pneg %p210
      // Predicated region
      $region37: #{tpu_custom_call.1} parent=5 // pred_check
        _
      $region38: #{tpu_custom_call.1} parent=5 // pred_check_branch
        %213 = sbr.rel (%p210) target = $region40
      $region39: #{tpu_custom_call.1} parent=5 // pred_region
        %s214 = ssub.s32 %s14, 1
        %p215 = scmp.lt.s32.totalorder %s23, 1
        %s216 = scalar_select %p215, %s23, 1
        %p217 = scmp.lt.s32.totalorder %s24, 1
        %s218 = scalar_select %p217, %s24, 1
        %s219 = smul.addr %s216, 2
        %s220 = sadd.s32 %s218, %s219
        %s221 = smul.addr %s220, 2
        %s222 = scalar_lea.vmem %s0, %s221
        %p223 = pneg %p54
        %p224 = pneg %p51
        %p225 = pneg %p75
        %p226 = pneg %p72
        %p227 = pneg %p96
        %p228 = pneg %p93
        %p229 = pneg %p117
        %p230 = pneg %p114
        %p231 = pneg %p138
        %p232 = pneg %p135
        %p233 = pneg %p166
        %p234 = pneg %p163
        %s235 = sand.u32 %s153, 1
        %s236 = scalar_lea.sflag [#allocation3], %s235
        %s237 = sand.u32 %s153, 1
        %s238 = smul.addr %s237, 2
        %s239 = scalar_lea.vmem [#allocation2], %s238
        %p240 = scmp.lt.s32.totalorder %s23, 1
        %s241 = scalar_select %p240, %s23, 1
        %p242 = scmp.lt.s32.totalorder %s24, 1
        %s243 = scalar_select %p242, %s24, 1
        %s244 = smul.addr %s241, 2
        %s245 = sadd.s32 %s243, %s244
        %s246 = smul.addr %s245, 2
        %s247 = scalar_lea.vmem %s0, %s246
        %v249 = vld [vmem:[%s247] sm:$0x3]
        %v250 = vld [vmem:[%s1] sm:$0xf]
        %v251 = vld [vmem:[%s2] sm:$0xff]
        %253 = vset.pattern.permute.xlu0 0
        %254 = vperm.xlu0 %253, %v251
        %v255 = vpop.permute.xlu0 %254
        %vm257 = vcmask 31744
        %v259 = vsel %vm257, %v250, 0
        %vm261 = vcmask 1041408
        %v263 = vsel %vm261, %v249, 0
        %265 = vmatpush.bf16.msra.mxu0 0
        %266 = vmatpush.bf16.msra.mxu0 0
        %267 = vmatpush.bf16.msra.mxu0 0
        %268 = vmatpush.bf16.msra.mxu0 0
        %269 = vmatpush.bf16.msra.mxu0 0
        %270 = vmatpush.bf16.msra.mxu0 0
        %271 = vmatpush.bf16.msra.mxu0 0
        %272 = vmatpush.bf16.msra.mxu0 %v263
        %273 = vmatmul.bf16.gmra.mxu0 %v259
        %v274 = vpop.f32.mrf.mxu0
        %v275 = vadd.f32 %v255, %v274
        %v276 = vpop.f32.mrf.mxu0
        %277 = vdwg.mxu0
        %v278 = vmax.f32 %v275, 0.0
        %v279 = vld [vmem:[%s3] sm:$0x3]
        %v280 = vpack.c.bf16 %v278, %v278
        %v281 = vld [vmem:[%s4] sm:$0xf]
        %283 = vset.pattern.permute.xlu0 0
        %284 = vperm.xlu0 %283, %v281
        %v285 = vpop.permute.xlu0 %284
        %vm287 = vcmask 64512
        %v289 = vsel %vm287, %v279, 0
        %vm291 = vcmask 1043456
        %v293 = vsel %vm291, %v280, 0
        %295 = vmatpush.bf16.msra.mxu0 0
        %296 = vmatpush.bf16.msra.mxu0 0
        %297 = vmatpush.bf16.msra.mxu0 0
        %298 = vmatpush.bf16.msra.mxu0 0
        %299 = vmatpush.bf16.msra.mxu0 0
        %300 = vmatpush.bf16.msra.mxu0 0
        %301 = vmatpush.bf16.msra.mxu0 0
        %302 = vmatpush.bf16.msra.mxu0 %v293
        %303 = vmatmul.bf16.gmra.mxu0 %v289
        %v304 = vpop.f32.mrf.mxu0
        %v305 = vadd.f32 %v285, %v304
        %v306 = vpop.f32.mrf.mxu0
        %307 = vdwg.mxu0
        %v308 = vpack.c.bf16 %v305, %v305
        %309 = vst [vmem:[%s239] sm:$0x3] %v308
        %s310 = sand.u32 %s153, 1
        %s311 = scalar_lea.sflag [#allocation3], %s310
        %s312 = sand.u32 %s153, 1
        %s313 = smul.addr %s312, 2
        %s314 = scalar_lea.vmem [#allocation2], %s313
        // Predicated region
        $region41: #{tpu_custom_call.1} parent=39 // pred_check
          %p315 = pneg %p163
        $region42: #{tpu_custom_call.1} parent=39 // pred_check_branch
          %317 = sbr.rel (%p315) target = $region44
        $region43: #{tpu_custom_call.1} parent=39 // pred_region
          %319 = vsyncadd %s311, 0
          %s320 = smul.addr %s23, 2
          %s321 = sadd.s32 %s24, %s320
          %s322 = smul.addr %s321, 2
          %s323 = scalar_lea.hbm %s5, %s322
          %s325 = sshll.u32 %s314, 4
          %s326 = int_to_ptr.vmem [resolvable:$true] %s325
          %s327 = sshll.u32 %s323, 4
          %s328 = int_to_ptr.hbm [resolvable:$true] %s327
          %330 = dma.vmem_to_hbm [thread:$0]  %s326, 32, %s328, %s311
        $region44: #{tpu_custom_call.1} parent=39 // pred_fallthru
          _
      $region40: #{tpu_custom_call.1} parent=5 // pred_fallthru
        _
      %p331 = scmp.le.s32.totalorder 2, %s14
      // Predicated region
      $region45: #{tpu_custom_call.1} parent=5 // pred_check
        %p332 = pneg %p331
      $region46: #{tpu_custom_call.1} parent=5 // pred_check_branch
        %334 = sbr.rel (%p332) target = $region48
      $region47: #{tpu_custom_call.1} parent=5 // pred_region
        %s335 = ssub.s32 %s14, 2
        // Predicated region
        $region49: #{tpu_custom_call.1} parent=47 // pred_check
          %p336 = pneg %p169
        $region50: #{tpu_custom_call.1} parent=47 // pred_check_branch
          %338 = sbr.rel (%p336) target = $region52
        $region51: #{tpu_custom_call.1} parent=47 // pred_region
          %s339 = sand.u32 %s154, 1
          %s340 = scalar_lea.sflag [#allocation3], %s339
          %s341 = sand.u32 %s154, 1
          %s342 = smul.addr %s341, 2
          %s343 = scalar_lea.vmem [#allocation2], %s342
          %345 = dma.done %s340, 32
        $region52: #{tpu_custom_call.1} parent=47 // pred_fallthru
          _
      $region48: #{tpu_custom_call.1} parent=5 // pred_fallthru
        _
    $region6: #{tpu_custom_call.1} parent=1 // loop_footer
      %s18 = sadd.s32 1, %s14
    $region7: #{tpu_custom_call.1} parent=1 // loop_footer_branch
      %13 = sbr.rel target = $region3
    $region8: #{tpu_custom_call.1} parent=1 // loop_exit
      _
    %346 = vsyncpa [#allocation3], 1
    %s347 = scalar_lea.sflag [#allocation3], 1
    %348 = vsyncpa %s347, 1

// kernel: tpu_custom_call.1
$region0: #{tpu_custom_call.1}
  #allocation0 [shape = 'u32[]', space=smem, size = 0x4, offset = 0x4, fixed_abs, tag = 'smem constant byte address 0x4 - core index']
  #allocation1 [shape = 'u32[72,128]{1,0:T(1,128)}', space=vmem, size = 0x9000, scoped, tag = 'internal scratch']
  %s0 = inlined_call_operand.vmem [shape: bf16[2,4,256], index: 0, kind: input, shape index: {}]
  %s1 = inlined_call_operand.vmem [shape: bf16[8,4], index: 1, kind: input, shape index: {}]
  %s2 = inlined_call_operand.vmem [shape: f32[8,1], index: 2, kind: input, shape index: {}]
  %s3 = inlined_call_operand.vmem [shape: bf16[4,8], index: 3, kind: input, shape index: {}]
  %s4 = inlined_call_operand.vmem [shape: f32[4,1], index: 4, kind: input, shape index: {}]
  %s5 = inlined_call_operand.hbm [shape: bf16[2,4,256], index: 5, kind: output, shape index: {}]
  %s6 = sld [smem:[#allocation0]]
  $region53: #{tpu_custom_call.1} parent=0
    _
  %s8 = ssub.s32 1, %s6
  %s9 = scalar_select 0, %s8, %s6
  $region1: #{tpu_custom_call.1} parent=0
    #allocation2 [shape = 'u8[2048]{0}', space=vmem, size = 0x800, scoped, tag = 'output window, operand 0']
    #allocation3 [shape = 's32[2]{0}', space=sflag, size = 0x8, scoped, tag = 'scoped memory for tpu_custom_call.1']
    %10 = vsyncpa [#allocation3], 0
    %s11 = scalar_lea.sflag [#allocation3], 1
    %12 = vsyncpa %s11, 0
    loop: start=0, step=1, limit=6
    $region2: #{tpu_custom_call.1} parent=1 // loop_pre_header
      _
    $region3: #{tpu_custom_call.1} parent=1 // loop_header
      %s14 = sphi 0, %s18
      %p15 = scmp.ge.s32.totalorder %s14, 6
      %s21 = sphi 0, %s33
      %s22 = sphi 0, %s29
      %s23 = sphi 0, %s21
      %s24 = sphi 0, %s22
      %s25 = sphi 0, %s23
      %s26 = sphi 0, %s24
      %s38 = sphi 0, %s40
      %s41 = sphi 0, %s38
      %s42 = sphi 0, %s41
      %s58 = sphi 0, %s42
      %s62 = sphi 0, %s62
      %s64 = sphi 0, %s62
      %s65 = sphi 0, %s64
      %s79 = sphi 0, %s65
      %s83 = sphi 0, %s83
      %s85 = sphi 0, %s83
      %s86 = sphi 0, %s85
      %s100 = sphi 0, %s86
      %s104 = sphi 0, %s104
      %s106 = sphi 0, %s104
      %s107 = sphi 0, %s106
      %s121 = sphi 0, %s107
      %s125 = sphi 0, %s125
      %s127 = sphi 0, %s125
      %s128 = sphi 0, %s127
      %s142 = sphi 0, %s128
      %s150 = sphi 0, %s152
      %s153 = sphi 0, %s150
      %s154 = sphi 0, %s153
      %s170 = sphi 0, %s154
    $region4: #{tpu_custom_call.1} parent=1 // loop_header_branch
      %17 = sbr.rel (%p15) target = $region8
    $region5: #{tpu_custom_call.1} parent=1 // loop_body
      %s19 = ssub.s32 %s14, 1
      %s20 = ssub.s32 %s14, 2
      %s27 = sadd.s32 1, %s22
      %p28 = scmp.ge.s32.totalorder %s27, 2
      %s29 = scalar_select %p28, 0, %s27
      %s30 = sadd.s32 1, %s21
      %s31 = scalar_select %p28, %s30, %s21
      %p32 = scmp.ge.s32.totalorder %s31, 2
      %s33 = scalar_select %p32, 0, %s31
      %s34 = ssub.s32 %s21, %s33
      %s35 = ssub.s32 %s22, %s29
      %s36 = sor.u32 %s34, %s35
      %p37 = scmp.eq.s32.totalorder %s36, 0
      %s39 = sadd.s32 %s38, 1
      %s40 = scalar_select %p37, %s38, %s39
      %p43 = pneg %p37
      %p44 = scmp.eq.s32.totalorder %s14, 3
      %p45 = por %p43, %p44
      %p46 = scmp.ne.s32.totalorder %s38, %s41
      %p47 = scmp.eq.s32.totalorder %s14, 0
      %p48 = por %p46, %p47
      %p49 = scmp.ne.s32.totalorder %s38, %s41
      %p50 = scmp.eq.s32.totalorder %s19, 3
      %p51 = por %p49, %p50
      %p52 = scmp.ne.s32.totalorder %s41, %s42
      %p53 = scmp.eq.s32.totalorder %s19, 0
      %p54 = por %p52, %p53
      %p55 = scmp.ne.s32.totalorder %s41, %s42
      %p56 = scmp.eq.s32.totalorder %s20, 3
      %p57 = por %p55, %p56
      %p59 = scmp.ne.s32.totalorder %s42, %s58
      %p60 = scmp.eq.s32.totalorder %s20, 0
      %p61 = por %p59, %p60
      %s63 = sadd.s32 %s62, 1
      %p66 = scmp.eq.s32.totalorder %s14, 3
      %p67 = scmp.ne.s32.totalorder %s62, %s64
      %p68 = scmp.eq.s32.totalorder %s14, 0
      %p69 = por %p67, %p68
      %p70 = scmp.ne.s32.totalorder %s62, %s64
      %p71 = scmp.eq.s32.totalorder %s19, 3
      %p72 = por %p70, %p71
      %p73 = scmp.ne.s32.totalorder %s64, %s65
      %p74 = scmp.eq.s32.totalorder %s19, 0
      %p75 = por %p73, %p74
      %p76 = scmp.ne.s32.totalorder %s64, %s65
      %p77 = scmp.eq.s32.totalorder %s20, 3
      %p78 = por %p76, %p77
      %p80 = scmp.ne.s32.totalorder %s65, %s79
      %p81 = scmp.eq.s32.totalorder %s20, 0
      %p82 = por %p80, %p81
      %s84 = sadd.s32 %s83, 1
      %p87 = scmp.eq.s32.totalorder %s14, 3
      %p88 = scmp.ne.s32.totalorder %s83, %s85
      %p89 = scmp.eq.s32.totalorder %s14, 0
      %p90 = por %p88, %p89
      %p91 = scmp.ne.s32.totalorder %s83, %s85
      %p92 = scmp.eq.s32.totalorder %s19, 3
      %p93 = por %p91, %p92
      %p94 = scmp.ne.s32.totalorder %s85, %s86
      %p95 = scmp.eq.s32.totalorder %s19, 0
      %p96 = por %p94, %p95
      %p97 = scmp.ne.s32.totalorder %s85, %s86
      %p98 = scmp.eq.s32.totalorder %s20, 3
      %p99 = por %p97, %p98
      %p101 = scmp.ne.s32.totalorder %s86, %s100
      %p102 = scmp.eq.s32.totalorder %s20, 0
      %p103 = por %p101, %p102
      %s105 = sadd.s32 %s104, 1
      %p108 = scmp.eq.s32.totalorder %s14, 3
      %p109 = scmp.ne.s32.totalorder %s104, %s106
      %p110 = scmp.eq.s32.totalorder %s14, 0
      %p111 = por %p109, %p110
      %p112 = scmp.ne.s32.totalorder %s104, %s106
      %p113 = scmp.eq.s32.totalorder %s19, 3
      %p114 = por %p112, %p113
      %p115 = scmp.ne.s32.totalorder %s106, %s107
      %p116 = scmp.eq.s32.totalorder %s19, 0
      %p117 = por %p115, %p116
      %p118 = scmp.ne.s32.totalorder %s106, %s107
      %p119 = scmp.eq.s32.totalorder %s20, 3
      %p120 = por %p118, %p119
      %p122 = scmp.ne.s32.totalorder %s107, %s121
      %p123 = scmp.eq.s32.totalorder %s20, 0
      %p124 = por %p122, %p123
      %s126 = sadd.s32 %s125, 1
      %p129 = scmp.eq.s32.totalorder %s14, 3
      %p130 = scmp.ne.s32.totalorder %s125, %s127
      %p131 = scmp.eq.s32.totalorder %s14, 0
      %p132 = por %p130, %p131
      %p133 = scmp.ne.s32.totalorder %s125, %s127
      %p134 = scmp.eq.s32.totalorder %s19, 3
      %p135 = por %p133, %p134
      %p136 = scmp.ne.s32.totalorder %s127, %s128
      %p137 = scmp.eq.s32.totalorder %s19, 0
      %p138 = por %p136, %p137
      %p139 = scmp.ne.s32.totalorder %s127, %s128
      %p140 = scmp.eq.s32.totalorder %s20, 3
      %p141 = por %p139, %p140
      %p143 = scmp.ne.s32.totalorder %s128, %s142
      %p144 = scmp.eq.s32.totalorder %s20, 0
      %p145 = por %p143, %p144
      %s146 = ssub.s32 %s21, %s33
      %s147 = ssub.s32 %s22, %s29
      %s148 = sor.u32 %s146, %s147
      %p149 = scmp.eq.s32.totalorder %s148, 0
      %s151 = sadd.s32 %s150, 1
      %s152 = scalar_select %p149, %s150, %s151
      %p155 = pneg %p149
      %p156 = scmp.eq.s32.totalorder %s14, 3
      %p157 = por %p155, %p156
      %p158 = scmp.ne.s32.totalorder %s150, %s153
      %p159 = scmp.eq.s32.totalorder %s14, 0
      %p160 = por %p158, %p159
      %p161 = scmp.ne.s32.totalorder %s150, %s153
      %p162 = scmp.eq.s32.totalorder %s19, 3
      %p163 = por %p161, %p162
      %p164 = scmp.ne.s32.totalorder %s153, %s154
      %p165 = scmp.eq.s32.totalorder %s19, 0
      %p166 = por %p164, %p165
      %p167 = scmp.ne.s32.totalorder %s153, %s154
      %p168 = scmp.eq.s32.totalorder %s20, 3
      %p169 = por %p167, %p168
      %p171 = scmp.ne.s32.totalorder %s154, %s170
      %p172 = scmp.eq.s32.totalorder %s20, 0
      %p173 = por %p171, %p172
      %p174 = scmp.le.s32.totalorder 1, %s14
      %p175 = scmp.lt.s32.totalorder %s14, 5
      %p176 = pnand %p174, %p175
      %p177 = pneg %p176
      // Predicated region
      $region9: #{tpu_custom_call.1} parent=5 // pred_check
        _
      $region10: #{tpu_custom_call.1} parent=5 // pred_check_branch
        %179 = sbr.rel (%p176) target = $region12
      $region11: #{tpu_custom_call.1} parent=5 // pred_region
        %s180 = ssub.s32 %s14, 1
        // Predicated region
        $region13: #{tpu_custom_call.1} parent=11 // pred_check
          %p181 = pneg %p75
        $region14: #{tpu_custom_call.1} parent=11 // pred_check_branch
          %183 = sbr.rel (%p181) target = $region16
        $region15: #{tpu_custom_call.1} parent=11 // pred_region
          _
        $region16: #{tpu_custom_call.1} parent=11 // pred_fallthru
          _
        // Predicated region
        $region17: #{tpu_custom_call.1} parent=11 // pred_check
          %p184 = pneg %p96
        $region18: #{tpu_custom_call.1} parent=11 // pred_check_branch
          %186 = sbr.rel (%p184) target = $region20
        $region19: #{tpu_custom_call.1} parent=11 // pred_region
          _
        $region20: #{tpu_custom_call.1} parent=11 // pred_fallthru
          _
        // Predicated region
        $region21: #{tpu_custom_call.1} parent=11 // pred_check
          %p187 = pneg %p117
        $region22: #{tpu_custom_call.1} parent=11 // pred_check_branch
          %189 = sbr.rel (%p187) target = $region24
        $region23: #{tpu_custom_call.1} parent=11 // pred_region
          _
        $region24: #{tpu_custom_call.1} parent=11 // pred_fallthru
          _
        // Predicated region
        $region25: #{tpu_custom_call.1} parent=11 // pred_check
          %p190 = pneg %p138
        $region26: #{tpu_custom_call.1} parent=11 // pred_check_branch
          %192 = sbr.rel (%p190) target = $region28
        $region27: #{tpu_custom_call.1} parent=11 // pred_region
          _
        $region28: #{tpu_custom_call.1} parent=11 // pred_fallthru
          _
      $region12: #{tpu_custom_call.1} parent=5 // pred_fallthru
        _
      %p193 = scmp.lt.s32.totalorder %s14, 4
      // Predicated region
      $region29: #{tpu_custom_call.1} parent=5 // pred_check
        %p194 = pneg %p193
      $region30: #{tpu_custom_call.1} parent=5 // pred_check_branch
        %196 = sbr.rel (%p194) target = $region32
      $region31: #{tpu_custom_call.1} parent=5 // pred_region
        // Predicated region
        $region33: #{tpu_custom_call.1} parent=31 // pred_check
          %p197 = pneg %p48
        $region34: #{tpu_custom_call.1} parent=31 // pred_check_branch
          %199 = sbr.rel (%p197) target = $region36
        $region35: #{tpu_custom_call.1} parent=31 // pred_region
          %p200 = scmp.lt.s32.totalorder %s21, 1
          %s201 = scalar_select %p200, %s21, 1
          %p202 = scmp.lt.s32.totalorder %s22, 1
          %s203 = scalar_select %p202, %s22, 1
          %s204 = smul.addr %s201, 2
          %s205 = sadd.s32 %s203, %s204
          %s206 = smul.addr %s205, 2
          %s207 = scalar_lea.vmem %s0, %s206
        $region36: #{tpu_custom_call.1} parent=31 // pred_fallthru
          _
      $region32: #{tpu_custom_call.1} parent=5 // pred_fallthru
        _
      %p208 = scmp.le.s32.totalorder 1, %s14
      %p209 = scmp.lt.s32.totalorder %s14, 5
      %p210 = pnand %p208, %p209
      %p211 = pneg %p210
      // Predicated region
      $region37: #{tpu_custom_call.1} parent=5 // pred_check
        _
      $region38: #{tpu_custom_call.1} parent=5 // pred_check_branch
        %213 = sbr.rel (%p210) target = $region40
      $region39: #{tpu_custom_call.1} parent=5 // pred_region
        %s214 = ssub.s32 %s14, 1
        %p215 = scmp.lt.s32.totalorder %s23, 1
        %s216 = scalar_select %p215, %s23, 1
        %p217 = scmp.lt.s32.totalorder %s24, 1
        %s218 = scalar_select %p217, %s24, 1
        %s219 = smul.addr %s216, 2
        %s220 = sadd.s32 %s218, %s219
        %s221 = smul.addr %s220, 2
        %s222 = scalar_lea.vmem %s0, %s221
        %p223 = pneg %p54
        %p224 = pneg %p51
        %p225 = pneg %p75
        %p226 = pneg %p72
        %p227 = pneg %p96
        %p228 = pneg %p93
        %p229 = pneg %p117
        %p230 = pneg %p114
        %p231 = pneg %p138
        %p232 = pneg %p135
        %p233 = pneg %p166
        %p234 = pneg %p163
        %s235 = sand.u32 %s153, 1
        %s236 = scalar_lea.sflag [#allocation3], %s235
        %s237 = sand.u32 %s153, 1
        %s238 = smul.addr %s237, 2
        %s239 = scalar_lea.vmem [#allocation2], %s238
        %p240 = scmp.lt.s32.totalorder %s23, 1
        %s241 = scalar_select %p240, %s23, 1
        %p242 = scmp.lt.s32.totalorder %s24, 1
        %s243 = scalar_select %p242, %s24, 1
        %s244 = smul.addr %s241, 2
        %s245 = sadd.s32 %s243, %s244
        %s246 = smul.addr %s245, 2
        %s247 = scalar_lea.vmem %s0, %s246
        %v249 = vld [vmem:[%s247] sm:$0x3]
        %v250 = vld [vmem:[%s1] sm:$0xf]
        %v251 = vld [vmem:[%s2] sm:$0xff]
        %253 = vset.pattern.permute.xlu0 0
        %254 = vperm.xlu0 %253, %v251
        %v255 = vpop.permute.xlu0 %254
        %vm257 = vcmask 31744
        %v259 = vsel %vm257, %v250, 0
        %vm261 = vcmask 1041408
        %v263 = vsel %vm261, %v249, 0
        %265 = vmatpush.bf16.msra.mxu0 0
        %266 = vmatpush.bf16.msra.mxu0 0
        %267 = vmatpush.bf16.msra.mxu0 0
        %268 = vmatpush.bf16.msra.mxu0 0
        %269 = vmatpush.bf16.msra.mxu0 0
        %270 = vmatpush.bf16.msra.mxu0 0
        %271 = vmatpush.bf16.msra.mxu0 0
        %272 = vmatpush.bf16.msra.mxu0 %v263
        %273 = vmatmul.bf16.gmra.mxu0 %v259
        %v274 = vpop.f32.mrf.mxu0
        %v275 = vadd.f32 %v255, %v274
        %v276 = vpop.f32.mrf.mxu0
        %277 = vdwg.mxu0
        %v278 = vmax.f32 %v275, 0.0
        %v279 = vld [vmem:[%s3] sm:$0x3]
        %v280 = vpack.c.bf16 %v278, %v278
        %v281 = vld [vmem:[%s4] sm:$0xf]
        %283 = vset.pattern.permute.xlu0 0
        %284 = vperm.xlu0 %283, %v281
        %v285 = vpop.permute.xlu0 %284
        %vm287 = vcmask 64512
        %v289 = vsel %vm287, %v279, 0
        %vm291 = vcmask 1043456
        %v293 = vsel %vm291, %v280, 0
        %295 = vmatpush.bf16.msra.mxu0 0
        %296 = vmatpush.bf16.msra.mxu0 0
        %297 = vmatpush.bf16.msra.mxu0 0
        %298 = vmatpush.bf16.msra.mxu0 0
        %299 = vmatpush.bf16.msra.mxu0 0
        %300 = vmatpush.bf16.msra.mxu0 0
        %301 = vmatpush.bf16.msra.mxu0 0
        %302 = vmatpush.bf16.msra.mxu0 %v293
        %303 = vmatmul.bf16.gmra.mxu0 %v289
        %v304 = vpop.f32.mrf.mxu0
        %v305 = vadd.f32 %v285, %v304
        %v306 = vpop.f32.mrf.mxu0
        %307 = vdwg.mxu0
        %v308 = vpack.c.bf16 %v305, %v305
        %309 = vst [vmem:[%s239] sm:$0x3] %v308
        %s310 = sand.u32 %s153, 1
        %s311 = scalar_lea.sflag [#allocation3], %s310
        %s312 = sand.u32 %s153, 1
        %s313 = smul.addr %s312, 2
        %s314 = scalar_lea.vmem [#allocation2], %s313
        // Predicated region
        $region41: #{tpu_custom_call.1} parent=39 // pred_check
          %p315 = pneg %p163
        $region42: #{tpu_custom_call.1} parent=39 // pred_check_branch
          %317 = sbr.rel (%p315) target = $region44
        $region43: #{tpu_custom_call.1} parent=39 // pred_region
          %319 = vsyncadd %s311, 0
          %s320 = smul.addr %s23, 2
          %s321 = sadd.s32 %s24, %s320
          %s322 = smul.addr %s321, 2
          %s323 = scalar_lea.hbm %s5, %s322
          %s325 = sshll.u32 %s314, 4
          %s326 = int_to_ptr.vmem [resolvable:$true] %s325
          %s327 = sshll.u32 %s323, 4
          %s328 = int_to_ptr.hbm [resolvable:$true] %s327
          %330 = dma.vmem_to_hbm [thread:$0]  %s326, 32, %s328, %s311
        $region44: #{tpu_custom_call.1} parent=39 // pred_fallthru
          _
      $region40: #{tpu_custom_call.1} parent=5 // pred_fallthru
        _
      %p331 = scmp.le.s32.totalorder 2, %s14
      // Predicated region
      $region45: #{tpu_custom_call.1} parent=5 // pred_check
        %p332 = pneg %p331
      $region46: #{tpu_custom_call.1} parent=5 // pred_check_branch
        %334 = sbr.rel (%p332) target = $region48
      $region47: #{tpu_custom_call.1} parent=5 // pred_region
        %s335 = ssub.s32 %s14, 2
        // Predicated region
        $region49: #{tpu_custom_call.1} parent=47 // pred_check
          %p336 = pneg %p169
        $region50: #{tpu_custom_call.1} parent=47 // pred_check_branch
          %338 = sbr.rel (%p336) target = $region52
        $region51: #{tpu_custom_call.1} parent=47 // pred_region
          %s339 = sand.u32 %s154, 1
          %s340 = scalar_lea.sflag [#allocation3], %s339
          %s341 = sand.u32 %s154, 1
          %s342 = smul.addr %s341, 2
          %s343 = scalar_lea.vmem [#allocation2], %s342
          %345 = dma.done %s340, 32
        $region52: #{tpu_custom_call.1} parent=47 // pred_fallthru
          _
      $region48: #{tpu_custom_call.1} parent=5 // pred_fallthru
        _
    $region6: #{tpu_custom_call.1} parent=1 // loop_footer
      %s18 = sadd.s32 1, %s14
    $region7: #{tpu_custom_call.1} parent=1 // loop_footer_branch
      %13 = sbr.rel target = $region3
    $region8: #{tpu_custom_call.1} parent=1 // loop_exit
      _
    %346 = vsyncpa [#allocation3], 1
    %s347 = scalar_lea.sflag [#allocation3], 1
    %348 = vsyncpa %s347, 1

</llo_original>
